<compile_context>
chip_gen: v7x
topology: tpu7x:2x2x1
jax: 0.10.0
libtpu: 0.0.40
codegen_flags: <defaults>
</compile_context>

<pallas_src>
import jax
import jax.numpy as jnp
from jax.experimental import pallas as pl
from jax.experimental.pallas import tpu as pltpu


_EPS = 1e-12            # torch.nn.functional.normalize default eps
_PIO2 = 1.5707963267948966


def _round_up(x, m):
    return (x + m - 1) // m * m


def _cdiv(a, b):
    return (a + b - 1) // b


def _l2_normalize(v):
    """F.normalize(dim=-1): v / max(||v||, eps) == v * rsqrt(max(||v||^2, eps^2))."""
    ssq = jnp.sum(v * v, axis=-1, keepdims=True)
    return v * jax.lax.rsqrt(jnp.maximum(ssq, _EPS * _EPS))


def _embedded_text_kernel(scale_ref, lhs_ref, rhs_ref, o_ref):
    # scale_ref: SMEM (1,) f32        -- 2 * weight (|w| * sign(w) == w, incl. w == 0)
    # lhs_ref:   VMEM (tr, D)         -- normalized row vectors (bf16 or f32)
    # rhs_ref:   VMEM (D, tc)         -- normalized column vectors, pre-transposed [K, N]
    # o_ref:     VMEM (tr, tc) f32    -- output tile (tc multiple of 128 -> lane-dense)
    dot = jax.lax.dot_general(
        lhs_ref[...], rhs_ref[...],
        (((1,), (0,)), ((), ())),
        preferred_element_type=jnp.float32)                         # (tr, tc)

    # Unit vectors: (||a - b|| / 2)^2 == 0.5 - 0.5 * (a . b).
    t = jnp.clip(0.5 - 0.5 * dot, 0.0, 1.0)
    half = jnp.sqrt(t)                                              # ||a - b|| / 2, in [0, 1]

    # Cephes single-precision arcsin(half); the small branch reuses t == half^2.
    big = half > 0.5
    z_big = 0.5 * (1.0 - half)
    xs = jnp.where(big, jnp.sqrt(z_big), half)
    z = jnp.where(big, z_big, t)
    p = ((((4.2163199048e-2 * z + 2.4181311049e-2) * z
           + 4.5470025998e-2) * z + 7.4953002686e-2) * z
         + 1.6666752422e-1) * z * xs + xs
    a = jnp.where(big, _PIO2 - 2.0 * p, p)

    # weight * (2 * arcsin(half)^2), with (2 * weight) prefolded on the host.
    o_ref[...] = (scale_ref[0] * (a * a)).astype(o_ref.dtype)


def embedded_text_forward(image_features, embed, weight=1.0, *,
                          tn=256, tm=512, use_bf16_matmul=True):
    """Pallas implementation of EmbeddedText.forward.

    image_features: [N, D]
    embed:          [M, D]   (registered buffer)
    weight:         scalar   (registered buffer)
    returns:        [N, M] float32
    """
    n, d = image_features.shape
    m, d2 = embed.shape
    assert d == d2, (d, d2)

    # Grid-invariant work hoisted out of the kernel: normalize both operands once.
    xn = _l2_normalize(image_features.astype(jnp.float32))
    en = _l2_normalize(embed.astype(jnp.float32))

    # Small-M fast path: keep the tiny text-embedding axis on the 8-wide sublane axis
    # and the large image-feature axis on the 128-wide lane axis.
    transpose_out = (m < 128) and (n >= 128)
    if transpose_out:
        lhs_rows, rhs_rows = en, xn           # output computed as [M, N]
        out_rows, out_cols = m, n
    else:
        lhs_rows, rhs_rows = xn, en           # output computed as [N, M]
        out_rows, out_cols = n, m

    mat_dtype = jnp.bfloat16 if use_bf16_matmul else jnp.float32
    lhs = lhs_rows.astype(mat_dtype)
    rhs = rhs_rows.T.astype(mat_dtype)        # (D, out_cols): canonical [K, N] matmul RHS

    # Tile sizes: rows multiple of 8 (sublane), output columns multiple of 128 (lane).
    tr = min(tn, _round_up(out_rows, 8))
    tc = min(tm, _round_up(out_cols, 128))
    # Guarantee >= 2 grid blocks when possible so both v7x TensorCores get work
    # (no-op on single-TC v5e / v6e).
    if _cdiv(out_rows, tr) * _cdiv(out_cols, tc) < 2:
        if out_rows > 8:
            tr = max(8, _round_up(_cdiv(out_rows, 2), 8))
        elif out_cols > 128:
            tc = max(128, _round_up(_cdiv(out_cols, 2), 128))

    r_pad = _round_up(out_rows, tr)
    c_pad = _round_up(out_cols, tc)
    if r_pad != out_rows:
        # Zero-padded rows stay finite through the whole pipeline and are sliced off.
        lhs = jnp.pad(lhs, ((0, r_pad - out_rows), (0, 0)))
    if c_pad != out_cols:
        rhs = jnp.pad(rhs, ((0, 0), (0, c_pad - out_cols)))

    nbr = r_pad // tr
    nbc = c_pad // tc

    # scale = 2 * weight:  |w| * (2*asin^2 * sign(w)) == (2*w) * asin^2, incl. w == 0.
    scale = (2.0 * jnp.asarray(weight, jnp.float32)).reshape((1,))

    # Grid order: the operand indexed by the inner axis is re-DMA'd every step; keep
    # the cheaper total refetch on the inner axis so double-buffering hides it.
    elem = jnp.dtype(mat_dtype).itemsize
    rows_outer = (nbr * d * c_pad * elem) <= (nbc * r_pad * d * elem) or nbc == 1
    if rows_outer:
        grid = (nbr, nbc)
        lhs_spec = pl.BlockSpec((tr, d), lambda i, j: (i, 0))
        rhs_spec = pl.BlockSpec((d, tc), lambda i, j: (0, j))
        out_spec = pl.BlockSpec((tr, tc), lambda i, j: (i, j))
    else:
        grid = (nbc, nbr)
        lhs_spec = pl.BlockSpec((tr, d), lambda j, i: (i, 0))
        rhs_spec = pl.BlockSpec((d, tc), lambda j, i: (0, j))
        out_spec = pl.BlockSpec((tr, tc), lambda j, i: (i, j))

    # Double-buffered lhs + rhs + out tiles with headroom; at least the 32 MiB scoped
    # default, capped at v7x's 64 MiB physical VMEM.
    vmem_need = 2 * (tr * d * elem + d * tc * elem + tr * tc * 4)
    vmem_limit = int(min(max(2 * vmem_need, 32 * 1024 * 1024), 64 * 1024 * 1024))

    out = pl.pallas_call(
        _embedded_text_kernel,
        out_shape=jax.ShapeDtypeStruct((r_pad, c_pad), jnp.float32),
        grid=grid,
        in_specs=[
            pl.BlockSpec(memory_space=pltpu.MemorySpace.SMEM),   # 2*weight scalar
            lhs_spec,
            rhs_spec,
        ],
        out_specs=out_spec,
        compiler_params=pltpu.CompilerParams(
            dimension_semantics=("parallel", "parallel"),
            vmem_limit_bytes=vmem_limit),
    )(scale, lhs, rhs)

    out = out[:out_rows, :out_cols]
    return out.T if transpose_out else out


def _reference_forward(image_features, embed, weight=1.0):
    """Pure-JAX transcription of the PyTorch forward (for validation)."""
    x = image_features[:, None, :].astype(jnp.float32)
    e = embed[None, :, :].astype(jnp.float32)
    xn = x / jnp.maximum(jnp.linalg.norm(x, axis=-1, keepdims=True), _EPS)
    en = e / jnp.maximum(jnp.linalg.norm(e, axis=-1, keepdims=True), _EPS)
    dist = jnp.linalg.norm(xn - en, axis=-1)
    dists = 2.0 * jnp.arcsin(dist / 2.0) ** 2
    w = jnp.asarray(weight, jnp.float32)
    return jnp.abs(w) * (dists * jnp.sign(w))


if __name__ == "__main__":
    key = jax.random.PRNGKey(0)
    k1, k2, k3, k4 = jax.random.split(key, 4)

    # Case 1: standard orientation (N image-feature rows, M text embeddings, dim D).
    N, M, D = 16, 8, 128
    image_features = jax.random.normal(k1, (N, D), dtype=jnp.float32)
    embed = jax.random.normal(k2, (M, D), dtype=jnp.float32)   # registered buffer
    # 'stop' buffer is unused in forward() -> not modeled.

    ref = _reference_forward(image_features, embed, 1.0)

    # Default path (bf16 MXU operands, f32 accumulation / elementwise).
    out = jax.block_until_ready(embedded_text_forward(image_features, embed, 1.0))
    assert out.shape == (N, M) and out.dtype == jnp.float32
    assert jnp.allclose(out, ref, rtol=2e-2, atol=5e-3), (
        f"bf16 path max abs err {jnp.max(jnp.abs(out - ref))}")

    # Full-f32 matmul path — tight agreement with the reference.
    out_f32 = jax.block_until_ready(
        embedded_text_forward(image_features, embed, 1.0, use_bf16_matmul=False))
    assert jnp.allclose(out_f32, ref, rtol=1e-3, atol=1e-4), (
        f"f32 path max abs err {jnp.max(jnp.abs(out_f32 - ref))}")

    # Negative weight (|w| * sign(w) == w, including through the folded 2*w scalar).
    ref_neg = _reference_forward(image_features, embed, -0.7)
    out_neg = jax.block_until_ready(
        embedded_text_forward(image_features, embed, -0.7, use_bf16_matmul=False))
    assert jnp.allclose(out_neg, ref_neg, rtol=1e-3, atol=1e-4), (
        f"neg-weight max abs err {jnp.max(jnp.abs(out_neg - ref_neg))}")

    # Case 2: small-M fast path (M < 128, N >= 128 -> transposed layout internally).
    N2, M2, D2 = 160, 8, 256
    imf2 = jax.random.normal(k3, (N2, D2), dtype=jnp.float32)
    emb2 = jax.random.normal(k4, (M2, D2), dtype=jnp.float32)
    ref2 = _reference_forward(imf2, emb2, 0.5)
    out2 = jax.block_until_ready(
        embedded_text_forward(imf2, emb2, 0.5, use_bf16_matmul=False))
    assert out2.shape == (N2, M2)
    assert jnp.allclose(out2, ref2, rtol=1e-3, atol=1e-4), (
        f"small-M path max abs err {jnp.max(jnp.abs(out2 - ref2))}")

    print("KERNEL_OK")
</pallas_src>

<mosaic_0001>
module attributes {stable_mosaic.version = 11 : i64} {
  func.func @_embedded_text_kernel(%arg0: i32, %arg1: i32, %arg2: memref<1xf32, #tpu.memory_space<smem>>, %arg3: memref<8x128xbf16, #tpu.memory_space<vmem>>, %arg4: memref<128x128xbf16, #tpu.memory_space<vmem>>, %arg5: memref<8x128xf32, #tpu.memory_space<vmem>>) attributes {dimension_semantics = [#tpu.dimension_semantics<parallel>, #tpu.dimension_semantics<parallel>], iteration_bounds = array<i64: 2, 1>, scalar_prefetch = 0 : i64, scratch_operands = 0 : i64, tpu.core_type = #tpu.core_type<tc>, window_params = [{transform_indices = @transform_0, window_bounds = array<i64: 1>}, {transform_indices = @transform_1, window_bounds = array<i64: 8, 128>}, {transform_indices = @transform_2, window_bounds = array<i64: 128, 128>}, {transform_indices = @transform_3, window_bounds = array<i64: 8, 128>}]} {
    %c0 = arith.constant 0 : index
    %c0_0 = arith.constant 0 : index
    %0 = vector.load %arg3[%c0, %c0_0] : memref<8x128xbf16, #tpu.memory_space<vmem>>, vector<8x128xbf16>
    %c0_1 = arith.constant 0 : index
    %c0_2 = arith.constant 0 : index
    %1 = vector.load %arg4[%c0_1, %c0_2] : memref<128x128xbf16, #tpu.memory_space<vmem>>, vector<128x128xbf16>
    %cst = arith.constant dense<0.000000e+00> : vector<8x128xf32>
    %2 = tpu.matmul %0, %1, %cst {dimension_numbers = #tpu.dot_dimension_numbers<[1], [0], [0], [1], [0, 0, 1, 1], [], []>} : vector<8x128xbf16>, vector<128x128xbf16>, vector<8x128xf32> -> vector<8x128xf32>
    %cst_3 = arith.constant 5.000000e-01 : f32
    %3 = vector.broadcast %cst_3 : f32 to vector<8x128xf32>
    %4 = arith.mulf %3, %2 : vector<8x128xf32>
    %cst_4 = arith.constant 5.000000e-01 : f32
    %5 = vector.broadcast %cst_4 : f32 to vector<8x128xf32>
    %6 = arith.subf %5, %4 : vector<8x128xf32>
    %cst_5 = arith.constant 0.000000e+00 : f32
    %cst_6 = arith.constant 1.000000e+00 : f32
    %7 = vector.broadcast %cst_5 : f32 to vector<8x128xf32>
    %8 = arith.maximumf %7, %6 : vector<8x128xf32>
    %9 = vector.broadcast %cst_6 : f32 to vector<8x128xf32>
    %10 = arith.minimumf %9, %8 : vector<8x128xf32>
    %11 = math.sqrt %10 : vector<8x128xf32>
    %cst_7 = arith.constant 5.000000e-01 : f32
    %12 = vector.broadcast %cst_7 : f32 to vector<8x128xf32>
    %13 = arith.cmpf ogt, %11, %12 : vector<8x128xf32>
    %cst_8 = arith.constant 1.000000e+00 : f32
    %14 = vector.broadcast %cst_8 : f32 to vector<8x128xf32>
    %15 = arith.subf %14, %11 : vector<8x128xf32>
    %cst_9 = arith.constant 5.000000e-01 : f32
    %16 = vector.broadcast %cst_9 : f32 to vector<8x128xf32>
    %17 = arith.mulf %16, %15 : vector<8x128xf32>
    %18 = math.sqrt %17 : vector<8x128xf32>
    %19 = arith.select %13, %18, %11 : vector<8x128xi1>, vector<8x128xf32>
    %20 = arith.select %13, %17, %10 : vector<8x128xi1>, vector<8x128xf32>
    %cst_10 = arith.constant 4.216320e-02 : f32
    %21 = vector.broadcast %cst_10 : f32 to vector<8x128xf32>
    %22 = arith.mulf %21, %20 : vector<8x128xf32>
    %cst_11 = arith.constant 0.024181312 : f32
    %23 = vector.broadcast %cst_11 : f32 to vector<8x128xf32>
    %24 = arith.addf %22, %23 : vector<8x128xf32>
    %25 = arith.mulf %24, %20 : vector<8x128xf32>
    %cst_12 = arith.constant 0.0454700254 : f32
    %26 = vector.broadcast %cst_12 : f32 to vector<8x128xf32>
    %27 = arith.addf %25, %26 : vector<8x128xf32>
    %28 = arith.mulf %27, %20 : vector<8x128xf32>
    %cst_13 = arith.constant 0.0749530047 : f32
    %29 = vector.broadcast %cst_13 : f32 to vector<8x128xf32>
    %30 = arith.addf %28, %29 : vector<8x128xf32>
    %31 = arith.mulf %30, %20 : vector<8x128xf32>
    %cst_14 = arith.constant 0.166667521 : f32
    %32 = vector.broadcast %cst_14 : f32 to vector<8x128xf32>
    %33 = arith.addf %31, %32 : vector<8x128xf32>
    %34 = arith.mulf %33, %20 : vector<8x128xf32>
    %35 = arith.mulf %34, %19 : vector<8x128xf32>
    %36 = arith.addf %35, %19 : vector<8x128xf32>
    %cst_15 = arith.constant 2.000000e+00 : f32
    %37 = vector.broadcast %cst_15 : f32 to vector<8x128xf32>
    %38 = arith.mulf %37, %36 : vector<8x128xf32>
    %cst_16 = arith.constant 1.57079637 : f32
    %39 = vector.broadcast %cst_16 : f32 to vector<8x128xf32>
    %40 = arith.subf %39, %38 : vector<8x128xf32>
    %41 = arith.select %13, %40, %36 : vector<8x128xi1>, vector<8x128xf32>
    %c0_17 = arith.constant 0 : index
    %42 = memref.load %arg2[%c0_17] : memref<1xf32, #tpu.memory_space<smem>>
    %43 = arith.mulf %41, %41 : vector<8x128xf32>
    %44 = vector.broadcast %42 : f32 to vector<8x128xf32>
    %45 = arith.mulf %44, %43 : vector<8x128xf32>
    %c0_18 = arith.constant 0 : index
    %c0_19 = arith.constant 0 : index
    %46 = vector.load %arg5[%c0_18, %c0_19] : memref<8x128xf32, #tpu.memory_space<vmem>>, vector<8x128xf32>
    tpu.vector_store %arg5[%c0_18, %c0_19], %45 {strides = array<i32>} : memref<8x128xf32, #tpu.memory_space<vmem>>, vector<8x128xf32>,
    return
  }
  func.func @transform_0(%arg0: i32, %arg1: i32) -> i32 {
    %c0_i32 = arith.constant 0 : i32
    %c0_i32_0 = arith.constant 0 : i32
    return %c0_i32 : i32
  }
  func.func @transform_1(%arg0: i32, %arg1: i32) -> (i32, i32) {
    %c0_i32 = arith.constant 0 : i32
    %c0_i32_0 = arith.constant 0 : i32
    return %arg0, %c0_i32 : i32, i32
  }
  func.func @transform_2(%arg0: i32, %arg1: i32) -> (i32, i32) {
    %c0_i32 = arith.constant 0 : i32
    %c0_i32_0 = arith.constant 0 : i32
    return %c0_i32, %arg1 : i32, i32
  }
  func.func @transform_3(%arg0: i32, %arg1: i32) -> (i32, i32) {
    %c0_i32 = arith.constant 0 : i32
    return %arg0, %arg1 : i32, i32
  }
}

</mosaic_0001>

<llo_original>
// kernel: tpu_custom_call.1
$region0: #{tpu_custom_call.1}
  #allocation0 [shape = 'u32[]', space=smem, size = 0x4, offset = 0x4, fixed_abs, tag = 'smem constant byte address 0x4 - core index']
  #allocation1 [shape = 'u32[144,128]{1,0:T(1,128)}', space=vmem, size = 0x12000, scoped, tag = 'internal scratch']
  #allocation2 [shape = 'f32[1]{0:T(128)S(6)}', space=smem, size = 0x200, scoped, tag = 'scoped memory for tpu_custom_call.1']
  %s0 = inlined_call_operand.<no memory space> [shape: f32[1], index: 0, kind: input, shape index: {}]
  %s1 = inlined_call_operand.hbm [shape: bf16[16,128], index: 1, kind: input, shape index: {}]
  %s2 = inlined_call_operand.hbm [shape: bf16[128,128], index: 2, kind: input, shape index: {}]
  %s3 = inlined_call_operand.hbm [shape: f32[16,128], index: 3, kind: output, shape index: {}]
  %s4 = sld [smem:[#allocation0]]
  $region53: #{tpu_custom_call.1} parent=0
    _
  %s6 = ssub.s32 1, %s4
  %s7 = scalar_select 0, %s6, %s4
  %8 = sst [smem:[#allocation2]] %s0
  $region1: #{tpu_custom_call.1} parent=0
    #allocation3 [shape = 'u8[4096]{0}', space=vmem, size = 0x1000, scoped, tag = 'input window, operand 1']
    #allocation4 [shape = 's32[2]{0}', space=sflag, size = 0x8, scoped, tag = 'scoped memory for tpu_custom_call.1']
    #allocation5 [shape = 's32[2]{0}', space=sflag, size = 0x8, scoped, tag = 'scoped memory for tpu_custom_call.1']
    #allocation6 [shape = 'u8[32768]{0}', space=vmem, size = 0x8000, scoped, tag = 'input window, operand 2, single buffered']
    #allocation7 [shape = 's32[1]{0}', space=sflag, size = 0x4, scoped, tag = 'scoped memory for tpu_custom_call.1']
    #allocation8 [shape = 'u8[8192]{0}', space=vmem, size = 0x2000, scoped, tag = 'output window, operand 0']
    %9 = vsyncpa [#allocation4], 0
    %s10 = scalar_lea.sflag [#allocation4], 1
    %11 = vsyncpa %s10, 0
    %12 = vsyncpa [#allocation7], 0
    %13 = vsyncpa [#allocation5], 0
    %s14 = scalar_lea.sflag [#allocation5], 1
    %15 = vsyncpa %s14, 0
    loop: start=0, step=1, limit=4
    $region2: #{tpu_custom_call.1} parent=1 // loop_pre_header
      _
    $region3: #{tpu_custom_call.1} parent=1 // loop_header
      %s17 = sphi 0, %s21
      %p18 = scmp.ge.s32.totalorder %s17, 4
      %s24 = sphi 0, %s36
      %s25 = sphi 0, %s32
      %s26 = sphi 0, %s24
      %s27 = sphi 0, %s25
      %s28 = sphi 0, %s26
      %s29 = sphi 0, %s27
      %s37 = sphi 0, %s37
      %s39 = sphi 0, %s37
      %s40 = sphi 0, %s39
      %s54 = sphi 0, %s40
      %s60 = sphi 0, %s62
      %s63 = sphi 0, %s60
      %s64 = sphi 0, %s63
      %s80 = sphi 0, %s64
      %s86 = sphi 0, %s88
      %s89 = sphi 0, %s86
      %s90 = sphi 0, %s89
      %s106 = sphi 0, %s90
      %s114 = sphi 0, %s116
      %s117 = sphi 0, %s114
      %s118 = sphi 0, %s117
      %s134 = sphi 0, %s118
    $region4: #{tpu_custom_call.1} parent=1 // loop_header_branch
      %20 = sbr.rel (%p18) target = $region8
    $region5: #{tpu_custom_call.1} parent=1 // loop_body
      %s22 = ssub.s32 %s17, 1
      %s23 = ssub.s32 %s17, 2
      %s30 = sadd.s32 1, %s25
      %p31 = scmp.ge.s32.totalorder %s30, 1
      %s32 = scalar_select %p31, 0, %s30
      %s33 = sadd.s32 1, %s24
      %s34 = scalar_select %p31, %s33, %s24
      %p35 = scmp.ge.s32.totalorder %s34, 2
      %s36 = scalar_select %p35, 0, %s34
      %s38 = sadd.s32 %s37, 1
      %p41 = scmp.eq.s32.totalorder %s17, 1
      %p42 = scmp.ne.s32.totalorder %s37, %s39
      %p43 = scmp.eq.s32.totalorder %s17, 0
      %p44 = por %p42, %p43
      %p45 = scmp.ne.s32.totalorder %s37, %s39
      %p46 = scmp.eq.s32.totalorder %s22, 1
      %p47 = por %p45, %p46
      %p48 = scmp.ne.s32.totalorder %s39, %s40
      %p49 = scmp.eq.s32.totalorder %s22, 0
      %p50 = por %p48, %p49
      %p51 = scmp.ne.s32.totalorder %s39, %s40
      %p52 = scmp.eq.s32.totalorder %s23, 1
      %p53 = por %p51, %p52
      %p55 = scmp.ne.s32.totalorder %s40, %s54
      %p56 = scmp.eq.s32.totalorder %s23, 0
      %p57 = por %p55, %p56
      %s58 = ssub.s32 %s24, %s36
      %p59 = scmp.eq.s32.totalorder %s58, 0
      %s61 = sadd.s32 %s60, 1
      %s62 = scalar_select %p59, %s60, %s61
      %p65 = pneg %p59
      %p66 = scmp.eq.s32.totalorder %s17, 1
      %p67 = por %p65, %p66
      %p68 = scmp.ne.s32.totalorder %s60, %s63
      %p69 = scmp.eq.s32.totalorder %s17, 0
      %p70 = por %p68, %p69
      %p71 = scmp.ne.s32.totalorder %s60, %s63
      %p72 = scmp.eq.s32.totalorder %s22, 1
      %p73 = por %p71, %p72
      %p74 = scmp.ne.s32.totalorder %s63, %s64
      %p75 = scmp.eq.s32.totalorder %s22, 0
      %p76 = por %p74, %p75
      %p77 = scmp.ne.s32.totalorder %s63, %s64
      %p78 = scmp.eq.s32.totalorder %s23, 1
      %p79 = por %p77, %p78
      %p81 = scmp.ne.s32.totalorder %s64, %s80
      %p82 = scmp.eq.s32.totalorder %s23, 0
      %p83 = por %p81, %p82
      %s84 = ssub.s32 %s25, %s32
      %p85 = scmp.eq.s32.totalorder %s84, 0
      %s87 = sadd.s32 %s86, 1
      %s88 = scalar_select %p85, %s86, %s87
      %p91 = pneg %p85
      %p92 = scmp.eq.s32.totalorder %s17, 1
      %p93 = por %p91, %p92
      %p94 = scmp.ne.s32.totalorder %s86, %s89
      %p95 = scmp.eq.s32.totalorder %s17, 0
      %p96 = por %p94, %p95
      %p97 = scmp.ne.s32.totalorder %s86, %s89
      %p98 = scmp.eq.s32.totalorder %s22, 1
      %p99 = por %p97, %p98
      %p100 = scmp.ne.s32.totalorder %s89, %s90
      %p101 = scmp.eq.s32.totalorder %s22, 0
      %p102 = por %p100, %p101
      %p103 = scmp.ne.s32.totalorder %s89, %s90
      %p104 = scmp.eq.s32.totalorder %s23, 1
      %p105 = por %p103, %p104
      %p107 = scmp.ne.s32.totalorder %s90, %s106
      %p108 = scmp.eq.s32.totalorder %s23, 0
      %p109 = por %p107, %p108
      %s110 = ssub.s32 %s24, %s36
      %s111 = ssub.s32 %s25, %s32
      %s112 = sor.u32 %s110, %s111
      %p113 = scmp.eq.s32.totalorder %s112, 0
      %s115 = sadd.s32 %s114, 1
      %s116 = scalar_select %p113, %s114, %s115
      %p119 = pneg %p113
      %p120 = scmp.eq.s32.totalorder %s17, 1
      %p121 = por %p119, %p120
      %p122 = scmp.ne.s32.totalorder %s114, %s117
      %p123 = scmp.eq.s32.totalorder %s17, 0
      %p124 = por %p122, %p123
      %p125 = scmp.ne.s32.totalorder %s114, %s117
      %p126 = scmp.eq.s32.totalorder %s22, 1
      %p127 = por %p125, %p126
      %p128 = scmp.ne.s32.totalorder %s117, %s118
      %p129 = scmp.eq.s32.totalorder %s22, 0
      %p130 = por %p128, %p129
      %p131 = scmp.ne.s32.totalorder %s117, %s118
      %p132 = scmp.eq.s32.totalorder %s23, 1
      %p133 = por %p131, %p132
      %p135 = scmp.ne.s32.totalorder %s118, %s134
      %p136 = scmp.eq.s32.totalorder %s23, 0
      %p137 = por %p135, %p136
      %p138 = scmp.le.s32.totalorder 1, %s17
      %p139 = scmp.lt.s32.totalorder %s17, 3
      %p140 = pnand %p138, %p139
      %p141 = pneg %p140
      // Predicated region
      $region9: #{tpu_custom_call.1} parent=5 // pred_check
        _
      $region10: #{tpu_custom_call.1} parent=5 // pred_check_branch
        %143 = sbr.rel (%p140) target = $region12
      $region11: #{tpu_custom_call.1} parent=5 // pred_region
        %s144 = ssub.s32 %s17, 1
        // Predicated region
        $region13: #{tpu_custom_call.1} parent=11 // pred_check
          %p145 = pneg %p50
        $region14: #{tpu_custom_call.1} parent=11 // pred_check_branch
          %147 = sbr.rel (%p145) target = $region16
        $region15: #{tpu_custom_call.1} parent=11 // pred_region
          _
        $region16: #{tpu_custom_call.1} parent=11 // pred_fallthru
          _
        // Predicated region
        $region17: #{tpu_custom_call.1} parent=11 // pred_check
          %p148 = pneg %p102
        $region18: #{tpu_custom_call.1} parent=11 // pred_check_branch
          %150 = sbr.rel (%p148) target = $region20
        $region19: #{tpu_custom_call.1} parent=11 // pred_region
          %s152 = ssub.s32 1024, 1024
          %153 = vsyncadd [#allocation7], %s152
          %s154 = smul.addr %s27, 64
          %s155 = scalar_lea.hbm %s2, %s154
          %s156 = sshll.u32 [#allocation6], 4
          %s157 = int_to_ptr.vmem [resolvable:$true] %s156
          %162 = dma.hbm_to_vmem [thread:$0]  %s155, 1024, %s157, [#allocation7], 64, 64, 4
        $region20: #{tpu_custom_call.1} parent=11 // pred_fallthru
          _
      $region12: #{tpu_custom_call.1} parent=5 // pred_fallthru
        _
      %p163 = scmp.lt.s32.totalorder %s17, 2
      // Predicated region
      $region21: #{tpu_custom_call.1} parent=5 // pred_check
        %p164 = pneg %p163
      $region22: #{tpu_custom_call.1} parent=5 // pred_check_branch
        %166 = sbr.rel (%p164) target = $region24
      $region23: #{tpu_custom_call.1} parent=5 // pred_region
        // Predicated region
        $region25: #{tpu_custom_call.1} parent=23 // pred_check
          %p167 = pneg %p70
        $region26: #{tpu_custom_call.1} parent=23 // pred_check_branch
          %169 = sbr.rel (%p167) target = $region28
        $region27: #{tpu_custom_call.1} parent=23 // pred_region
          %s170 = sand.u32 %s60, 1
          %s171 = scalar_lea.sflag [#allocation4], %s170
          %s172 = sand.u32 %s60, 1
          %s173 = smul.addr %s172, 4
          %s174 = scalar_lea.vmem [#allocation3], %s173
          %s176 = ssub.s32 64, 64
          %177 = vsyncadd %s171, %s176
          %s178 = smul.addr %s24, 64
          %s179 = scalar_lea.hbm %s1, %s178
          %s181 = sshll.u32 %s174, 4
          %s182 = int_to_ptr.vmem [resolvable:$true] %s181
          %184 = dma.hbm_to_vmem [thread:$0]  %s179, 64, %s182, %s171
        $region28: #{tpu_custom_call.1} parent=23 // pred_fallthru
          _
      $region24: #{tpu_custom_call.1} parent=5 // pred_fallthru
        _
      %p185 = scmp.le.s32.totalorder 1, %s17
      %p186 = scmp.lt.s32.totalorder %s17, 3
      %p187 = pnand %p185, %p186
      %p188 = pneg %p187
      // Predicated region
      $region29: #{tpu_custom_call.1} parent=5 // pred_check
        _
      $region30: #{tpu_custom_call.1} parent=5 // pred_check_branch
        %190 = sbr.rel (%p187) target = $region32
      $region31: #{tpu_custom_call.1} parent=5 // pred_region
        %s191 = ssub.s32 %s17, 1
        %s192 = sand.u32 %s63, 1
        %s193 = scalar_lea.sflag [#allocation4], %s192
        %s194 = sand.u32 %s63, 1
        %s195 = smul.addr %s194, 4
        %s196 = scalar_lea.vmem [#allocation3], %s195
        // Predicated region
        $region33: #{tpu_custom_call.1} parent=31 // pred_check
          %p197 = pneg %p76
        $region34: #{tpu_custom_call.1} parent=31 // pred_check_branch
          %199 = sbr.rel (%p197) target = $region36
        $region35: #{tpu_custom_call.1} parent=31 // pred_region
          %200 = dma.done %s193, 64
        $region36: #{tpu_custom_call.1} parent=31 // pred_fallthru
          _
        // Predicated region
        $region37: #{tpu_custom_call.1} parent=31 // pred_check
          %p201 = pneg %p102
        $region38: #{tpu_custom_call.1} parent=31 // pred_check_branch
          %203 = sbr.rel (%p201) target = $region40
        $region39: #{tpu_custom_call.1} parent=31 // pred_region
          %204 = dma.done [#allocation7], 1024
        $region40: #{tpu_custom_call.1} parent=31 // pred_fallthru
          _
        %p205 = pneg %p50
        %p206 = pneg %p47
        %s207 = sand.u32 %s63, 1
        %s208 = scalar_lea.sflag [#allocation4], %s207
        %s209 = sand.u32 %s63, 1
        %s210 = smul.addr %s209, 4
        %s211 = scalar_lea.vmem [#allocation3], %s210
        %p212 = pneg %p76
        %p213 = pneg %p73
        %p214 = pneg %p102
        %p215 = pneg %p99
        %p216 = pneg %p130
        %p217 = pneg %p127
        %s218 = sand.u32 %s117, 1
        %s219 = scalar_lea.sflag [#allocation5], %s218
        %s220 = sand.u32 %s117, 1
        %s221 = smul.addr %s220, 8
        %s222 = scalar_lea.vmem [#allocation8], %s221
        %v224 = vld [vmem:[%s196] sm:$0xf]
        %v225 = vld [vmem:[#allocation6] sm:$0xf]
        %v226 = vld [vmem:[#allocation6 + $0x4] sm:$0xf]
        %v227 = vld [vmem:[#allocation6 + $0x8] sm:$0xf]
        %v228 = vld [vmem:[#allocation6 + $0xc] sm:$0xf]
        %v229 = vld [vmem:[#allocation6 + $0x10] sm:$0xf]
        %v230 = vld [vmem:[#allocation6 + $0x14] sm:$0xf]
        %v231 = vld [vmem:[#allocation6 + $0x18] sm:$0xf]
        %v232 = vld [vmem:[#allocation6 + $0x1c] sm:$0xf]
        %v233 = vld [vmem:[#allocation6 + $0x20] sm:$0xf]
        %v234 = vld [vmem:[#allocation6 + $0x24] sm:$0xf]
        %v235 = vld [vmem:[#allocation6 + $0x28] sm:$0xf]
        %v236 = vld [vmem:[#allocation6 + $0x2c] sm:$0xf]
        %v237 = vld [vmem:[#allocation6 + $0x30] sm:$0xf]
        %v238 = vld [vmem:[#allocation6 + $0x34] sm:$0xf]
        %v239 = vld [vmem:[#allocation6 + $0x38] sm:$0xf]
        %v240 = vld [vmem:[#allocation6 + $0x3c] sm:$0xf]
        %v257 = vunpack.c.l.b16 %v225
        %v258 = vunpack.c.l.b16 %v226
        %v259 = vunpack.c.l.b16 %v227
        %v260 = vunpack.c.l.b16 %v228
        %v261 = vunpack.c.l.b16 %v229
        %v262 = vunpack.c.l.b16 %v230
        %v263 = vunpack.c.l.b16 %v231
        %v264 = vunpack.c.l.b16 %v232
        %v265 = vunpack.c.l.b16 %v233
        %v266 = vunpack.c.l.b16 %v234
        %v267 = vunpack.c.l.b16 %v235
        %v268 = vunpack.c.l.b16 %v236
        %v269 = vunpack.c.l.b16 %v237
        %v270 = vunpack.c.l.b16 %v238
        %v271 = vunpack.c.l.b16 %v239
        %v272 = vunpack.c.l.b16 %v240
        %v273 = vpack.c.b16 %v258, %v257
        %v274 = vpack.c.b16 %v260, %v259
        %v275 = vpack.c.b16 %v262, %v261
        %v276 = vpack.c.b16 %v264, %v263
        %v277 = vpack.c.b16 %v266, %v265
        %v278 = vpack.c.b16 %v268, %v267
        %v279 = vpack.c.b16 %v270, %v269
        %v280 = vpack.c.b16 %v272, %v271
        %289 = vmatprep.subr.bf16.mxu0 0
        %290 = vmatpush1.bf16.msra.mxu0 %v273
        %291 = vmatprep.subr.bf16.mxu0 0
        %292 = vmatpush1.bf16.msra.mxu0 %v274
        %293 = vmatprep.subr.bf16.mxu0 0
        %294 = vmatpush1.bf16.msra.mxu0 %v275
        %295 = vmatprep.subr.bf16.mxu0 0
        %296 = vmatpush1.bf16.msra.mxu0 %v276
        %297 = vmatprep.subr.bf16.mxu0 0
        %298 = vmatpush1.bf16.msra.mxu0 %v277
        %299 = vmatprep.subr.bf16.mxu0 0
        %300 = vmatpush1.bf16.msra.mxu0 %v278
        %301 = vmatprep.subr.bf16.mxu0 0
        %302 = vmatpush1.bf16.msra.mxu0 %v279
        %303 = vmatprep.subr.bf16.mxu0 0
        %304 = vmatpush1.bf16.msra.mxu0 %v280
        %305 = vmatprep.subr.bf16.mxu0 0
        %306 = vmatpush1.bf16.msra.mxu0 0
        %307 = vmatprep.subr.bf16.mxu0 0
        %308 = vmatpush1.bf16.msra.mxu0 0
        %309 = vmatprep.subr.bf16.mxu0 0
        %310 = vmatpush1.bf16.msra.mxu0 0
        %311 = vmatprep.subr.bf16.mxu0 0
        %312 = vmatpush1.bf16.msra.mxu0 0
        %313 = vmatprep.subr.bf16.mxu0 0
        %314 = vmatpush1.bf16.msra.mxu0 0
        %315 = vmatprep.subr.bf16.mxu0 0
        %316 = vmatpush1.bf16.msra.mxu0 0
        %317 = vmatprep.subr.bf16.mxu0 0
        %318 = vmatpush1.bf16.msra.mxu0 0
        %319 = vmatprep.subr.bf16.mxu0 0
        %320 = vmatpush1.bf16.msra.mxu0 0
        %321 = vmatprep.mubr.bf16.mxu0 0
        %322 = vmatmul.mubr.bf16.gmra.mrb[0].mxu0 %v224
        %v323 = vpop.f32.mrb[0].mxu0
        %v324 = vadd.f32 0.0, %v323
        %v325 = vpop.f32.mrb[0].mxu0
        %v326 = vpop.f32.mrb[0].mxu0
        %v327 = vpop.f32.mrb[0].mxu0
        %328 = vdwg.mxu0
        %v329 = vmul.f32 %v324, 0.5
        %v330 = vsub.f32 0.5, %v329
        %v331 = vmax.f32 %v330, 0.0
        %v332 = vmin.f32 %v331, 1.0
        %v333 = vrsqrt.pop %v332
        %v334 = vmul.f32 %v332, %v333
        %vm335 = vcmp.eq.f32.partialorder %v332, inf
        %v336 = vsel %vm335, %v332, %v334
        %vm337 = vcmp.eq.f32.partialorder %v332, 0.0
        %v338 = vand.u32 %v332, 2147483648
        %v339 = vsel %vm337, %v338, %v336
        %vm340 = vcmp.gt.f32.partialorder %v339, 0.5
        %v341 = vsub.f32 1.0, %v339
        %v342 = vmul.f32 %v341, 0.5
        %v343 = vrsqrt.pop %v342
        %v344 = vmul.f32 %v342, %v343
        %vm345 = vcmp.eq.f32.partialorder %v342, inf
        %v346 = vsel %vm345, %v342, %v344
        %vm347 = vcmp.eq.f32.partialorder %v342, 0.0
        %v348 = vand.u32 %v342, 2147483648
        %v349 = vsel %vm347, %v348, %v346
        %v350 = vsel %vm340, %v349, %v339
        %v351 = vsel %vm340, %v342, %v332
        %v352 = vmul.f32 %v351, 0.0421632
        %v353 = vadd.f32 %v352, 0.024181312
        %v354 = vmul.f32 %v353, %v351
        %v355 = vadd.f32 %v354, 0.045470025
        %v356 = vmul.f32 %v355, %v351
        %v357 = vadd.f32 %v356, 0.074953005
        %v358 = vmul.f32 %v357, %v351
        %v359 = vadd.f32 %v358, 0.16666752
        %v360 = vmul.f32 %v359, %v351
        %v361 = vmul.f32 %v360, %v350
        %v362 = vadd.f32 %v361, %v350
        %v363 = vmul.f32 %v362, 2.0
        %v364 = vsub.f32 1.5707964, %v363
        %v365 = vsel %vm340, %v364, %v362
        %s366 = sld [smem:[#allocation2]]
        %v367 = vmul.f32 %v365, %v365
        %v368 = vstv %s366
        %v369 = vmul.f32 %v368, %v367
        %370 = vst [vmem:[%s222] sm:$0xff] %v369
        %s371 = sand.u32 %s117, 1
        %s372 = scalar_lea.sflag [#allocation5], %s371
        %s373 = sand.u32 %s117, 1
        %s374 = smul.addr %s373, 8
        %s375 = scalar_lea.vmem [#allocation8], %s374
        // Predicated region
        $region41: #{tpu_custom_call.1} parent=31 // pred_check
          %p376 = pneg %p127
        $region42: #{tpu_custom_call.1} parent=31 // pred_check_branch
          %378 = sbr.rel (%p376) target = $region44
        $region43: #{tpu_custom_call.1} parent=31 // pred_region
          %s380 = ssub.s32 128, 128
          %381 = vsyncadd %s372, %s380
          %s382 = sadd.s32 %s27, %s26
          %s383 = smul.addr %s382, 128
          %s384 = scalar_lea.hbm %s3, %s383
          %s386 = sshll.u32 %s375, 4
          %s387 = int_to_ptr.vmem [resolvable:$true] %s386
          %389 = dma.vmem_to_hbm [thread:$0]  %s387, 128, %s384, %s372
        $region44: #{tpu_custom_call.1} parent=31 // pred_fallthru
          _
      $region32: #{tpu_custom_call.1} parent=5 // pred_fallthru
        _
      %p390 = scmp.le.s32.totalorder 2, %s17
      // Predicated region
      $region45: #{tpu_custom_call.1} parent=5 // pred_check
        %p391 = pneg %p390
      $region46: #{tpu_custom_call.1} parent=5 // pred_check_branch
        %393 = sbr.rel (%p391) target = $region48
      $region47: #{tpu_custom_call.1} parent=5 // pred_region
        %s394 = ssub.s32 %s17, 2
        // Predicated region
        $region49: #{tpu_custom_call.1} parent=47 // pred_check
          %p395 = pneg %p133
        $region50: #{tpu_custom_call.1} parent=47 // pred_check_branch
          %397 = sbr.rel (%p395) target = $region52
        $region51: #{tpu_custom_call.1} parent=47 // pred_region
          %s398 = sand.u32 %s118, 1
          %s399 = scalar_lea.sflag [#allocation5], %s398
          %s400 = sand.u32 %s118, 1
          %s401 = smul.addr %s400, 8
          %s402 = scalar_lea.vmem [#allocation8], %s401
          %403 = dma.done %s399, 128
        $region52: #{tpu_custom_call.1} parent=47 // pred_fallthru
          _
      $region48: #{tpu_custom_call.1} parent=5 // pred_fallthru
        _
    $region6: #{tpu_custom_call.1} parent=1 // loop_footer
      %s21 = sadd.s32 1, %s17
    $region7: #{tpu_custom_call.1} parent=1 // loop_footer_branch
      %16 = sbr.rel target = $region3
    $region8: #{tpu_custom_call.1} parent=1 // loop_exit
      _
    %404 = vsyncpa [#allocation4], 1
    %s405 = scalar_lea.sflag [#allocation4], 1
    %406 = vsyncpa %s405, 1
    %407 = vsyncpa [#allocation7], 1
    %408 = vsyncpa [#allocation5], 1
    %s409 = scalar_lea.sflag [#allocation5], 1
    %410 = vsyncpa %s409, 1

</llo_original>
